<compile_context>
chip_gen: v7x
topology: tpu7x:2x2x1
jax: 0.10.0
libtpu: 0.0.40
codegen_flags: <defaults>
</compile_context>

<pallas_src>
import functools

import jax
import jax.numpy as jnp
from jax.experimental import pallas as pl
from jax.experimental.pallas import tpu as pltpu


_MIN_GRID_STEPS = 4  # aim for >= 4 grid steps so pipelining / megacore engage


def _cdiv(a, b):
    return -(-a // b)


def _sublane_multiple(dtype):
    """Second-to-last block dim granularity for packed dtypes (8/16/32)."""
    itemsize = jnp.dtype(dtype).itemsize
    return max(8, 8 * (4 // max(itemsize, 1)))


@functools.lru_cache(maxsize=None)
def _hw_params():
    """(block_f32_bytes, vmem_limit_bytes): generation aware, safe fallback.

    v5e/v6e (128 MiB physical VMEM): 8 MiB f32-equivalent blocks, 64 MiB limit.
    v7x (64 MiB physical) or unknown: 4 MiB blocks, 48 MiB limit."""
    block_f32 = 4 * 1024 * 1024
    vmem_limit = 48 * 1024 * 1024
    try:
        info = pltpu.get_tpu_info()
        cap = getattr(info, "vmem_capacity_bytes", 0) or 0
        if cap >= 100 * 1024 * 1024:
            block_f32 = 8 * 1024 * 1024
            vmem_limit = 64 * 1024 * 1024
    except Exception:
        pass
    return block_f32, vmem_limit


def _choose_tile(total, unit, target_units, min_steps):
    """Tile = k*unit (or `total` itself), k*unit <= target_units*unit, trying
    to leave at least `min_steps` grid steps along this axis when possible."""
    total_units = max(1, _cdiv(total, unit))
    cap_units = max(1, _cdiv(total_units, min_steps))
    units = max(1, min(int(target_units), cap_units))
    tile = units * unit
    if tile >= total:
        tile = total          # "block equals full dim" exemption from (8,128)
    return tile


# ---------------------------------------------------------------------------
# channels_last, wide C (>= 128 or C that does not divide 128):
# tile (TR, C), normalize over the last (lane) axis.
# ---------------------------------------------------------------------------
def _ln_lane_kernel(x_ref, w_ref, b_ref, o_ref, *, eps):
    x = x_ref[...].astype(jnp.float32)                     # (TR, C)
    mean = jnp.mean(x, axis=-1, keepdims=True)             # single pass:
    mean_sq = jnp.mean(x * x, axis=-1, keepdims=True)      #   E[x], E[x^2]
    var = jnp.maximum(mean_sq - mean * mean, 0.0)          # biased (torch)
    inv = jax.lax.rsqrt(var + eps)                         # EUP
    o_ref[...] = ((x - mean) * inv * w_ref[...] + b_ref[...]).astype(o_ref.dtype)


def _layernorm_cl_wide(x2d, weight, bias, eps, block_bytes, vmem_limit):
    rows, C = x2d.shape
    itemsize = jnp.dtype(x2d.dtype).itemsize
    mult = _sublane_multiple(x2d.dtype)
    target_units = max(1, (block_bytes // max(C * itemsize, 1)) // mult)
    tr = _choose_tile(rows, mult, target_units, _MIN_GRID_STEPS)

    w2d = weight.astype(jnp.float32).reshape(1, C)
    b2d = bias.astype(jnp.float32).reshape(1, C)

    return pl.pallas_call(
        functools.partial(_ln_lane_kernel, eps=eps),
        out_shape=jax.ShapeDtypeStruct((rows, C), x2d.dtype),
        grid_spec=pltpu.PrefetchScalarGridSpec(
            num_scalar_prefetch=0,
            grid=(_cdiv(rows, tr),),            # ragged last block is masked
            in_specs=[
                pl.BlockSpec((tr, C), lambda i: (i, 0)),
                pl.BlockSpec((1, C), lambda i: (0, 0)),
                pl.BlockSpec((1, C), lambda i: (0, 0)),
            ],
            out_specs=pl.BlockSpec((tr, C), lambda i: (i, 0)),
        ),
        compiler_params=pltpu.CompilerParams(
            dimension_semantics=("parallel",),
            vmem_limit_bytes=vmem_limit),
    )(x2d, w2d, b2d)


# ---------------------------------------------------------------------------
# channels_last, small C (C < 128 and 128 % C == 0):
# fold g = 128 // C rows into the lane axis so the output stays lane dense.
# Per-row stats are recovered with a block-diagonal ones matmul on the MXU.
# ---------------------------------------------------------------------------
def _ln_packed_kernel(x_ref, w_ref, b_ref, a_ref, o_ref, *, eps, c):
    x = x_ref[...].astype(jnp.float32)                     # (TR, 128)
    a = a_ref[...]                                         # (128, 128) 0/1
    inv_c = 1.0 / float(c)
    sum_x = jnp.dot(x, a, preferred_element_type=jnp.float32)      # group sums
    sum_x2 = jnp.dot(x * x, a, preferred_element_type=jnp.float32)
    mean = sum_x * inv_c
    var = jnp.maximum(sum_x2 * inv_c - mean * mean, 0.0)
    inv = jax.lax.rsqrt(var + eps)
    o_ref[...] = ((x - mean) * inv * w_ref[...] + b_ref[...]).astype(o_ref.dtype)


def _layernorm_cl_packed(x2d, weight, bias, eps, block_bytes, vmem_limit):
    rows, C = x2d.shape
    g = 128 // C
    L = g * C                                              # == 128, lane dense
    pad = (-rows) % g
    if pad:
        # Lane groups must stay row-aligned in the folded view; pad rows get
        # garbage stats (rsqrt(eps)) which is sliced off below.
        x2d = jnp.pad(x2d, ((0, pad), (0, 0)))
    prow = (rows + pad) // g
    xp = x2d.reshape(prow, L)                              # free, contiguous

    itemsize = jnp.dtype(x2d.dtype).itemsize
    mult = _sublane_multiple(x2d.dtype)
    target_units = max(1, (block_bytes // (L * itemsize)) // mult)
    tr = _choose_tile(prow, mult, target_units, _MIN_GRID_STEPS)

    w_t = jnp.tile(weight.astype(jnp.float32), g).reshape(1, L)
    b_t = jnp.tile(bias.astype(jnp.float32), g).reshape(1, L)
    # Block-diagonal ones: A[i, j] = 1 iff lanes i and j belong to the same row.
    gi = jax.lax.broadcasted_iota(jnp.int32, (L, L), 0) // C
    gj = jax.lax.broadcasted_iota(jnp.int32, (L, L), 1) // C
    a = (gi == gj).astype(jnp.float32)

    out = pl.pallas_call(
        functools.partial(_ln_packed_kernel, eps=eps, c=C),
        out_shape=jax.ShapeDtypeStruct((prow, L), x2d.dtype),
        grid_spec=pltpu.PrefetchScalarGridSpec(
            num_scalar_prefetch=0,
            grid=(_cdiv(prow, tr),),
            in_specs=[
                pl.BlockSpec((tr, L), lambda i: (i, 0)),
                pl.BlockSpec((1, L), lambda i: (0, 0)),
                pl.BlockSpec((1, L), lambda i: (0, 0)),
                pl.BlockSpec((L, L), lambda i: (0, 0)),
            ],
            out_specs=pl.BlockSpec((tr, L), lambda i: (i, 0)),
        ),
        compiler_params=pltpu.CompilerParams(
            dimension_semantics=("parallel",),
            vmem_limit_bytes=vmem_limit),
    )(xp, w_t, b_t, a)
    out = out.reshape(rows + pad, C)
    return out[:rows] if pad else out


# ---------------------------------------------------------------------------
# channels_first: native (B, C, H*W) layout, block (TB, C, T), reduce over C
# (sublane axis); the H*W axis stays lane dense.  No wrapper transposes.
# ---------------------------------------------------------------------------
def _ln_cf_kernel(x_ref, w_ref, b_ref, o_ref, *, eps):
    x = x_ref[...].astype(jnp.float32)                     # (TB, C, T)
    mean = jnp.mean(x, axis=1, keepdims=True)
    mean_sq = jnp.mean(x * x, axis=1, keepdims=True)
    var = jnp.maximum(mean_sq - mean * mean, 0.0)
    inv = jax.lax.rsqrt(var + eps)
    # w/b are (C, 1) f32; broadcast against (TB, C, T).
    o_ref[...] = ((x - mean) * inv * w_ref[...] + b_ref[...]).astype(o_ref.dtype)


def _layernorm_channels_first(x, weight, bias, eps, block_bytes, vmem_limit):
    B, C, H, W = x.shape
    HW = H * W
    x3 = x.reshape(B, C, HW)                               # free reshape
    itemsize = jnp.dtype(x.dtype).itemsize
    col_bytes = C * itemsize

    if HW * col_bytes <= block_bytes:
        # Small spatial extent: take all of H*W and batch the block over B so
        # per-step overhead is amortized and DMAs stay large.
        t = HW
        tb = max(1, block_bytes // max(HW * col_bytes, 1))
        tb = min(tb, B)
        tb = min(tb, max(1, _cdiv(B, _MIN_GRID_STEPS)))    # keep >= ~4 steps
    else:
        tb = 1
        target_units = max(1, (block_bytes // col_bytes) // 128)
        t = _choose_tile(HW, 128, target_units, _MIN_GRID_STEPS)

    w2d = weight.astype(jnp.float32).reshape(C, 1)
    b2d = bias.astype(jnp.float32).reshape(C, 1)

    out = pl.pallas_call(
        functools.partial(_ln_cf_kernel, eps=eps),
        out_shape=jax.ShapeDtypeStruct((B, C, HW), x.dtype),
        grid_spec=pltpu.PrefetchScalarGridSpec(
            num_scalar_prefetch=0,
            grid=(_cdiv(B, tb), _cdiv(HW, t)),   # ragged blocks are masked
            in_specs=[
                pl.BlockSpec((tb, C, t), lambda b, j: (b, 0, j)),
                pl.BlockSpec((C, 1), lambda b, j: (0, 0)),
                pl.BlockSpec((C, 1), lambda b, j: (0, 0)),
            ],
            out_specs=pl.BlockSpec((tb, C, t), lambda b, j: (b, 0, j)),
        ),
        compiler_params=pltpu.CompilerParams(
            dimension_semantics=("parallel", "parallel"),
            vmem_limit_bytes=vmem_limit),
    )(x3, w2d, b2d)
    return out.reshape(B, C, H, W)


# ---------------------------------------------------------------------------
# Public wrapper matching the PyTorch module semantics.
# ---------------------------------------------------------------------------
def layer_norm(x, weight, bias, eps=1e-6, data_format="channels_last",
               block_bytes=None, vmem_limit_bytes=None):
    """Pallas LayerNorm matching the PyTorch module.

    channels_last : x is (..., C), normalized over the last axis.
    channels_first: x is (B, C, H, W), normalized over axis 1 (native layout).
    """
    if data_format not in ("channels_last", "channels_first"):
        raise NotImplementedError

    block_f32, auto_vmem = _hw_params()
    if vmem_limit_bytes is None:
        vmem_limit_bytes = auto_vmem
    if block_bytes is None:
        itemsize = jnp.dtype(x.dtype).itemsize
        # Scale the input block with itemsize so the in-kernel f32 upcast
        # (the dominant temporary) stays at ~block_f32 per step.
        block_bytes = max(64 * 1024, block_f32 * itemsize // 4)

    if data_format == "channels_last":
        C = x.shape[-1]
        lead = x.shape[:-1]
        x2d = x.reshape(-1, C)
        if C < 128 and 128 % C == 0:
            out = _layernorm_cl_packed(x2d, weight, bias, eps, block_bytes,
                                       vmem_limit_bytes)
        else:
            # TODO(synk): lane packing for small C that does not divide 128
            # (needs a non-uniform group matrix / per-block lane masking).
            out = _layernorm_cl_wide(x2d, weight, bias, eps, block_bytes,
                                     vmem_limit_bytes)
        return out.reshape(*lead, C)
    else:
        return _layernorm_channels_first(x, weight, bias, eps, block_bytes,
                                         vmem_limit_bytes)


def _ref_layer_norm(x, weight, bias, eps, data_format):
    if data_format == "channels_last":
        u = jnp.mean(x, axis=-1, keepdims=True)
        s = jnp.mean((x - u) ** 2, axis=-1, keepdims=True)
        return (x - u) / jnp.sqrt(s + eps) * weight + bias
    else:
        u = jnp.mean(x, axis=1, keepdims=True)
        s = jnp.mean((x - u) ** 2, axis=1, keepdims=True)
        xn = (x - u) / jnp.sqrt(s + eps)
        return weight[None, :, None, None] * xn + bias[None, :, None, None]


if __name__ == "__main__":
    key = jax.random.PRNGKey(0)
    keys = jax.random.split(key, 6)
    eps = 1e-6

    def params(c):
        w = jnp.ones((c,), jnp.float32) + 0.01 * jnp.arange(c, dtype=jnp.float32)
        b = 0.001 * jnp.arange(c, dtype=jnp.float32)
        return w, b

    # 1) channels_last, small C (lane-packed path), C=32
    C = 32
    w, b = params(C)
    x = jax.random.normal(keys[0], (2, 8, 8, C), jnp.float32)
    y = jax.block_until_ready(layer_norm(x, w, b, eps, "channels_last"))
    ref = _ref_layer_norm(x, w, b, eps, "channels_last")
    assert jnp.allclose(y, ref, atol=1e-4, rtol=1e-4), "cl packed C=32"

    # 2) channels_last, ragged rows (rows % g != 0) + forced multi-step grid
    x = jax.random.normal(keys[1], (2, 5, 7, C), jnp.float32)   # rows = 70
    y = jax.block_until_ready(
        layer_norm(x, w, b, eps, "channels_last", block_bytes=4096))
    ref = _ref_layer_norm(x, w, b, eps, "channels_last")
    assert jnp.allclose(y, ref, atol=1e-4, rtol=1e-4), "cl packed ragged"

    # 3) channels_last, wide C (lane-reduction path), C=256
    C2 = 256
    w2, b2 = params(C2)
    x = jax.random.normal(keys[2], (2, 4, 4, C2), jnp.float32)
    y = jax.block_until_ready(layer_norm(x, w2, b2, eps, "channels_last"))
    ref = _ref_layer_norm(x, w2, b2, eps, "channels_last")
    assert jnp.allclose(y, ref, atol=1e-4, rtol=1e-4), "cl wide C=256"

    # 4) channels_last, C that does not divide 128 -> wide fallback, C=48
    C3 = 48
    w3, b3 = params(C3)
    x = jax.random.normal(keys[3], (2, 6, 6, C3), jnp.float32)
    y = jax.block_until_ready(layer_norm(x, w3, b3, eps, "channels_last"))
    ref = _ref_layer_norm(x, w3, b3, eps, "channels_last")
    assert jnp.allclose(y, ref, atol=1e-4, rtol=1e-4), "cl fallback C=48"

    # 5) channels_first, small HW (batched block over B), native layout
    x = jax.random.normal(keys[4], (2, C, 8, 8), jnp.float32)
    y = jax.block_until_ready(layer_norm(x, w, b, eps, "channels_first"))
    ref = _ref_layer_norm(x, w, b, eps, "channels_first")
    assert jnp.allclose(y, ref, atol=1e-4, rtol=1e-4), "cf small HW"

    # 6) channels_first, ragged H*W tile
    x = jax.random.normal(keys[5], (1, C, 10, 13), jnp.float32)  # HW = 130
    y = jax.block_until_ready(
        layer_norm(x, w, b, eps, "channels_first", block_bytes=16384))
    ref = _ref_layer_norm(x, w, b, eps, "channels_first")
    assert jnp.allclose(y, ref, atol=1e-4, rtol=1e-4), "cf ragged HW"

    # 7) bf16 input, channels_last packed path (f32 stats, bf16 store)
    xb = jax.random.normal(keys[0], (2, 8, 8, C), jnp.float32).astype(jnp.bfloat16)
    yb = jax.block_until_ready(layer_norm(xb, w, b, eps, "channels_last"))
    refb = _ref_layer_norm(xb.astype(jnp.float32), w, b, eps, "channels_last")
    assert jnp.allclose(yb.astype(jnp.float32), refb, atol=2e-2, rtol=2e-2), "cl bf16"

    print("KERNEL_OK")
</pallas_src>

<mosaic_0001>
module attributes {stable_mosaic.version = 11 : i64} {
  func.func @_ln_packed_kernel(%arg0: i32, %arg1: memref<8x128xf32, #tpu.memory_space<vmem>>, %arg2: memref<1x128xf32, #tpu.memory_space<vmem>>, %arg3: memref<1x128xf32, #tpu.memory_space<vmem>>, %arg4: memref<128x128xf32, #tpu.memory_space<vmem>>, %arg5: memref<8x128xf32, #tpu.memory_space<vmem>>) attributes {dimension_semantics = [#tpu.dimension_semantics<parallel>], iteration_bounds = array<i64: 4>, scalar_prefetch = 0 : i64, scratch_operands = 0 : i64, tpu.core_type = #tpu.core_type<tc>, window_params = [{transform_indices = @transform_0, window_bounds = array<i64: 8, 128>}, {pipeline_mode = #tpu.pipeline_mode<synchronous>, transform_indices = @transform_1, window_bounds = array<i64: 1, 128>}, {pipeline_mode = #tpu.pipeline_mode<synchronous>, transform_indices = @transform_2, window_bounds = array<i64: 1, 128>}, {pipeline_mode = #tpu.pipeline_mode<synchronous>, transform_indices = @transform_3, window_bounds = array<i64: 128, 128>}, {transform_indices = @transform_4, window_bounds = array<i64: 8, 128>}]} {
    %c0 = arith.constant 0 : index
    %c0_0 = arith.constant 0 : index
    %0 = vector.load %arg1[%c0, %c0_0] : memref<8x128xf32, #tpu.memory_space<vmem>>, vector<8x128xf32>
    %c0_1 = arith.constant 0 : index
    %c0_2 = arith.constant 0 : index
    %1 = vector.load %arg4[%c0_1, %c0_2] : memref<128x128xf32, #tpu.memory_space<vmem>>, vector<128x128xf32>
    %cst = arith.constant dense<0.000000e+00> : vector<8x128xf32>
    %2 = tpu.matmul %0, %1, %cst {dimension_numbers = #tpu.dot_dimension_numbers<[1], [0], [0], [1], [0, 0, 1, 1], [], []>} : vector<8x128xf32>, vector<128x128xf32>, vector<8x128xf32> -> vector<8x128xf32>
    %3 = arith.mulf %0, %0 : vector<8x128xf32>
    %cst_3 = arith.constant dense<0.000000e+00> : vector<8x128xf32>
    %4 = tpu.matmul %3, %1, %cst_3 {dimension_numbers = #tpu.dot_dimension_numbers<[1], [0], [0], [1], [0, 0, 1, 1], [], []>} : vector<8x128xf32>, vector<128x128xf32>, vector<8x128xf32> -> vector<8x128xf32>
    %cst_4 = arith.constant 3.125000e-02 : f32
    %5 = vector.broadcast %cst_4 : f32 to vector<8x128xf32>
    %6 = arith.mulf %2, %5 : vector<8x128xf32>
    %cst_5 = arith.constant 3.125000e-02 : f32
    %7 = vector.broadcast %cst_5 : f32 to vector<8x128xf32>
    %8 = arith.mulf %4, %7 : vector<8x128xf32>
    %9 = arith.mulf %6, %6 : vector<8x128xf32>
    %10 = arith.subf %8, %9 : vector<8x128xf32>
    %cst_6 = arith.constant 0.000000e+00 : f32
    %11 = vector.broadcast %cst_6 : f32 to vector<8x128xf32>
    %12 = arith.maximumf %10, %11 : vector<8x128xf32>
    %cst_7 = arith.constant 9.99999997E-7 : f32
    %13 = vector.broadcast %cst_7 : f32 to vector<8x128xf32>
    %14 = arith.addf %12, %13 : vector<8x128xf32>
    %15 = math.rsqrt %14 : vector<8x128xf32>
    %16 = arith.subf %0, %6 : vector<8x128xf32>
    %17 = arith.mulf %16, %15 : vector<8x128xf32>
    %c0_8 = arith.constant 0 : index
    %c0_9 = arith.constant 0 : index
    %18 = vector.load %arg2[%c0_8, %c0_9] : memref<1x128xf32, #tpu.memory_space<vmem>>, vector<1x128xf32>
    %19 = vector.broadcast %18 : vector<1x128xf32> to vector<8x128xf32>
    %20 = arith.mulf %17, %19 : vector<8x128xf32>
    %c0_10 = arith.constant 0 : index
    %c0_11 = arith.constant 0 : index
    %21 = vector.load %arg3[%c0_10, %c0_11] : memref<1x128xf32, #tpu.memory_space<vmem>>, vector<1x128xf32>
    %22 = vector.broadcast %21 : vector<1x128xf32> to vector<8x128xf32>
    %23 = arith.addf %20, %22 : vector<8x128xf32>
    %c0_12 = arith.constant 0 : index
    %c0_13 = arith.constant 0 : index
    %24 = vector.load %arg5[%c0_12, %c0_13] : memref<8x128xf32, #tpu.memory_space<vmem>>, vector<8x128xf32>
    tpu.vector_store %arg5[%c0_12, %c0_13], %23 {strides = array<i32>} : memref<8x128xf32, #tpu.memory_space<vmem>>, vector<8x128xf32>,
    return
  }
  func.func @transform_0(%arg0: i32) -> (i32, i32) {
    %c0_i32 = arith.constant 0 : i32
    %c0_i32_0 = arith.constant 0 : i32
    return %arg0, %c0_i32 : i32, i32
  }
  func.func @transform_1(%arg0: i32) -> (i32, i32) {
    %c0_i32 = arith.constant 0 : i32
    %c0_i32_0 = arith.constant 0 : i32
    %c0_i32_1 = arith.constant 0 : i32
    return %c0_i32, %c0_i32_0 : i32, i32
  }
  func.func @transform_2(%arg0: i32) -> (i32, i32) {
    %c0_i32 = arith.constant 0 : i32
    %c0_i32_0 = arith.constant 0 : i32
    %c0_i32_1 = arith.constant 0 : i32
    return %c0_i32, %c0_i32_0 : i32, i32
  }
  func.func @transform_3(%arg0: i32) -> (i32, i32) {
    %c0_i32 = arith.constant 0 : i32
    %c0_i32_0 = arith.constant 0 : i32
    %c0_i32_1 = arith.constant 0 : i32
    return %c0_i32, %c0_i32_0 : i32, i32
  }
  func.func @transform_4(%arg0: i32) -> (i32, i32) {
    %c0_i32 = arith.constant 0 : i32
    %c0_i32_0 = arith.constant 0 : i32
    return %arg0, %c0_i32 : i32, i32
  }
}

</mosaic_0001>

<llo_original>
// kernel: tpu_custom_call.1
$region0: #{tpu_custom_call.1}
  #allocation0 [shape = 'u32[]', space=smem, size = 0x4, offset = 0x4, fixed_abs, tag = 'smem constant byte address 0x4 - core index']
  #allocation1 [shape = 'u32[144,128]{1,0:T(1,128)}', space=vmem, size = 0x12000, scoped, tag = 'internal scratch']
  %s0 = inlined_call_operand.hbm [shape: f32[32,128], index: 0, kind: input, shape index: {}]
  %s1 = inlined_call_operand.vmem [shape: f32[1,128], index: 1, kind: input, shape index: {}]
  %s2 = inlined_call_operand.vmem [shape: f32[1,128], index: 2, kind: input, shape index: {}]
  %s3 = inlined_call_operand.hbm [shape: f32[128,128], index: 3, kind: input, shape index: {}]
  %s4 = inlined_call_operand.hbm [shape: f32[32,128], index: 4, kind: output, shape index: {}]
  %s5 = sld [smem:[#allocation0]]
  $region57: #{tpu_custom_call.1} parent=0
    _
  %s7 = ssub.s32 1, %s5
  %s8 = scalar_select 0, %s7, %s5
  $region1: #{tpu_custom_call.1} parent=0
    #allocation2 [shape = 'u8[8192]{0}', space=vmem, size = 0x2000, scoped, tag = 'input window, operand 0']
    #allocation3 [shape = 's32[2]{0}', space=sflag, size = 0x8, scoped, tag = 'scoped memory for tpu_custom_call.1']
    #allocation4 [shape = 's32[2]{0}', space=sflag, size = 0x8, scoped, tag = 'scoped memory for tpu_custom_call.1']
    #allocation5 [shape = 'u8[65536]{0}', space=vmem, size = 0x10000, scoped, tag = 'input window, operand 3, single buffered']
    #allocation6 [shape = 's32[1]{0}', space=sflag, size = 0x4, scoped, tag = 'scoped memory for tpu_custom_call.1']
    #allocation7 [shape = 'u8[8192]{0}', space=vmem, size = 0x2000, scoped, tag = 'output window, operand 0']
    %9 = vsyncpa [#allocation3], 0
    %s10 = scalar_lea.sflag [#allocation3], 1
    %11 = vsyncpa %s10, 0
    %12 = vsyncpa [#allocation6], 0
    %13 = vsyncpa [#allocation4], 0
    %s14 = scalar_lea.sflag [#allocation4], 1
    %15 = vsyncpa %s14, 0
    loop: start=0, step=1, limit=6
    $region2: #{tpu_custom_call.1} parent=1 // loop_pre_header
      _
    $region3: #{tpu_custom_call.1} parent=1 // loop_header
      %s17 = sphi 0, %s21
      %p18 = scmp.ge.s32.totalorder %s17, 6
      %s27 = sphi 0, %s29
      %s30 = sphi 0, %s27
      %s31 = sphi 0, %s30
      %s47 = sphi 0, %s31
      %s51 = sphi 0, %s51
      %s53 = sphi 0, %s51
      %s54 = sphi 0, %s53
      %s68 = sphi 0, %s54
      %s72 = sphi 0, %s72
      %s74 = sphi 0, %s72
      %s75 = sphi 0, %s74
      %s89 = sphi 0, %s75
      %s93 = sphi 0, %s93
      %s95 = sphi 0, %s93
      %s96 = sphi 0, %s95
      %s110 = sphi 0, %s96
      %s116 = sphi 0, %s118
      %s119 = sphi 0, %s116
      %s120 = sphi 0, %s119
      %s136 = sphi 0, %s120
    $region4: #{tpu_custom_call.1} parent=1 // loop_header_branch
      %20 = sbr.rel (%p18) target = $region8
    $region5: #{tpu_custom_call.1} parent=1 // loop_body
      %s22 = ssub.s32 %s17, 1
      %s23 = ssub.s32 %s17, 2
      %s24 = sadd.s32 %s17, 1
      %s25 = ssub.s32 %s17, %s24
      %p26 = scmp.eq.s32.totalorder %s25, 0
      %s28 = sadd.s32 %s27, 1
      %s29 = scalar_select %p26, %s27, %s28
      %p32 = pneg %p26
      %p33 = scmp.eq.s32.totalorder %s17, 3
      %p34 = por %p32, %p33
      %p35 = scmp.ne.s32.totalorder %s27, %s30
      %p36 = scmp.eq.s32.totalorder %s17, 0
      %p37 = por %p35, %p36
      %p38 = scmp.ne.s32.totalorder %s27, %s30
      %p39 = scmp.eq.s32.totalorder %s22, 3
      %p40 = por %p38, %p39
      %p41 = scmp.ne.s32.totalorder %s30, %s31
      %p42 = scmp.eq.s32.totalorder %s22, 0
      %p43 = por %p41, %p42
      %p44 = scmp.ne.s32.totalorder %s30, %s31
      %p45 = scmp.eq.s32.totalorder %s23, 3
      %p46 = por %p44, %p45
      %p48 = scmp.ne.s32.totalorder %s31, %s47
      %p49 = scmp.eq.s32.totalorder %s23, 0
      %p50 = por %p48, %p49
      %s52 = sadd.s32 %s51, 1
      %p55 = scmp.eq.s32.totalorder %s17, 3
      %p56 = scmp.ne.s32.totalorder %s51, %s53
      %p57 = scmp.eq.s32.totalorder %s17, 0
      %p58 = por %p56, %p57
      %p59 = scmp.ne.s32.totalorder %s51, %s53
      %p60 = scmp.eq.s32.totalorder %s22, 3
      %p61 = por %p59, %p60
      %p62 = scmp.ne.s32.totalorder %s53, %s54
      %p63 = scmp.eq.s32.totalorder %s22, 0
      %p64 = por %p62, %p63
      %p65 = scmp.ne.s32.totalorder %s53, %s54
      %p66 = scmp.eq.s32.totalorder %s23, 3
      %p67 = por %p65, %p66
      %p69 = scmp.ne.s32.totalorder %s54, %s68
      %p70 = scmp.eq.s32.totalorder %s23, 0
      %p71 = por %p69, %p70
      %s73 = sadd.s32 %s72, 1
      %p76 = scmp.eq.s32.totalorder %s17, 3
      %p77 = scmp.ne.s32.totalorder %s72, %s74
      %p78 = scmp.eq.s32.totalorder %s17, 0
      %p79 = por %p77, %p78
      %p80 = scmp.ne.s32.totalorder %s72, %s74
      %p81 = scmp.eq.s32.totalorder %s22, 3
      %p82 = por %p80, %p81
      %p83 = scmp.ne.s32.totalorder %s74, %s75
      %p84 = scmp.eq.s32.totalorder %s22, 0
      %p85 = por %p83, %p84
      %p86 = scmp.ne.s32.totalorder %s74, %s75
      %p87 = scmp.eq.s32.totalorder %s23, 3
      %p88 = por %p86, %p87
      %p90 = scmp.ne.s32.totalorder %s75, %s89
      %p91 = scmp.eq.s32.totalorder %s23, 0
      %p92 = por %p90, %p91
      %s94 = sadd.s32 %s93, 1
      %p97 = scmp.eq.s32.totalorder %s17, 3
      %p98 = scmp.ne.s32.totalorder %s93, %s95
      %p99 = scmp.eq.s32.totalorder %s17, 0
      %p100 = por %p98, %p99
      %p101 = scmp.ne.s32.totalorder %s93, %s95
      %p102 = scmp.eq.s32.totalorder %s22, 3
      %p103 = por %p101, %p102
      %p104 = scmp.ne.s32.totalorder %s95, %s96
      %p105 = scmp.eq.s32.totalorder %s22, 0
      %p106 = por %p104, %p105
      %p107 = scmp.ne.s32.totalorder %s95, %s96
      %p108 = scmp.eq.s32.totalorder %s23, 3
      %p109 = por %p107, %p108
      %p111 = scmp.ne.s32.totalorder %s96, %s110
      %p112 = scmp.eq.s32.totalorder %s23, 0
      %p113 = por %p111, %p112
      %s114 = ssub.s32 %s17, %s24
      %p115 = scmp.eq.s32.totalorder %s114, 0
      %s117 = sadd.s32 %s116, 1
      %s118 = scalar_select %p115, %s116, %s117
      %p121 = pneg %p115
      %p122 = scmp.eq.s32.totalorder %s17, 3
      %p123 = por %p121, %p122
      %p124 = scmp.ne.s32.totalorder %s116, %s119
      %p125 = scmp.eq.s32.totalorder %s17, 0
      %p126 = por %p124, %p125
      %p127 = scmp.ne.s32.totalorder %s116, %s119
      %p128 = scmp.eq.s32.totalorder %s22, 3
      %p129 = por %p127, %p128
      %p130 = scmp.ne.s32.totalorder %s119, %s120
      %p131 = scmp.eq.s32.totalorder %s22, 0
      %p132 = por %p130, %p131
      %p133 = scmp.ne.s32.totalorder %s119, %s120
      %p134 = scmp.eq.s32.totalorder %s23, 3
      %p135 = por %p133, %p134
      %p137 = scmp.ne.s32.totalorder %s120, %s136
      %p138 = scmp.eq.s32.totalorder %s23, 0
      %p139 = por %p137, %p138
      %p140 = scmp.le.s32.totalorder 1, %s17
      %p141 = scmp.lt.s32.totalorder %s17, 5
      %p142 = pnand %p140, %p141
      %p143 = pneg %p142
      // Predicated region
      $region9: #{tpu_custom_call.1} parent=5 // pred_check
        _
      $region10: #{tpu_custom_call.1} parent=5 // pred_check_branch
        %145 = sbr.rel (%p142) target = $region12
      $region11: #{tpu_custom_call.1} parent=5 // pred_region
        %s146 = ssub.s32 %s17, 1
        // Predicated region
        $region13: #{tpu_custom_call.1} parent=11 // pred_check
          %p147 = pneg %p64
        $region14: #{tpu_custom_call.1} parent=11 // pred_check_branch
          %149 = sbr.rel (%p147) target = $region16
        $region15: #{tpu_custom_call.1} parent=11 // pred_region
          _
        $region16: #{tpu_custom_call.1} parent=11 // pred_fallthru
          _
        // Predicated region
        $region17: #{tpu_custom_call.1} parent=11 // pred_check
          %p150 = pneg %p85
        $region18: #{tpu_custom_call.1} parent=11 // pred_check_branch
          %152 = sbr.rel (%p150) target = $region20
        $region19: #{tpu_custom_call.1} parent=11 // pred_region
          _
        $region20: #{tpu_custom_call.1} parent=11 // pred_fallthru
          _
        // Predicated region
        $region21: #{tpu_custom_call.1} parent=11 // pred_check
          %p153 = pneg %p106
        $region22: #{tpu_custom_call.1} parent=11 // pred_check_branch
          %155 = sbr.rel (%p153) target = $region24
        $region23: #{tpu_custom_call.1} parent=11 // pred_region
          %s157 = ssub.s32 2048, 2048
          %158 = vsyncadd [#allocation6], %s157
          %s159 = sshll.u32 [#allocation5], 4
          %s160 = int_to_ptr.vmem [resolvable:$true] %s159
          %165 = dma.hbm_to_vmem [thread:$0]  %s3, 2048, %s160, [#allocation6], 128, 128, 8
        $region24: #{tpu_custom_call.1} parent=11 // pred_fallthru
          _
      $region12: #{tpu_custom_call.1} parent=5 // pred_fallthru
        _
      %p166 = scmp.lt.s32.totalorder %s17, 4
      // Predicated region
      $region25: #{tpu_custom_call.1} parent=5 // pred_check
        %p167 = pneg %p166
      $region26: #{tpu_custom_call.1} parent=5 // pred_check_branch
        %169 = sbr.rel (%p167) target = $region28
      $region27: #{tpu_custom_call.1} parent=5 // pred_region
        // Predicated region
        $region29: #{tpu_custom_call.1} parent=27 // pred_check
          %p170 = pneg %p37
        $region30: #{tpu_custom_call.1} parent=27 // pred_check_branch
          %172 = sbr.rel (%p170) target = $region32
        $region31: #{tpu_custom_call.1} parent=27 // pred_region
          %s173 = sand.u32 %s27, 1
          %s174 = scalar_lea.sflag [#allocation3], %s173
          %s175 = sand.u32 %s27, 1
          %s176 = smul.addr %s175, 8
          %s177 = scalar_lea.vmem [#allocation2], %s176
          %s179 = ssub.s32 128, 128
          %180 = vsyncadd %s174, %s179
          %s181 = smul.addr %s17, 128
          %s182 = scalar_lea.hbm %s0, %s181
          %s184 = sshll.u32 %s177, 4
          %s185 = int_to_ptr.vmem [resolvable:$true] %s184
          %187 = dma.hbm_to_vmem [thread:$0]  %s182, 128, %s185, %s174
        $region32: #{tpu_custom_call.1} parent=27 // pred_fallthru
          _
      $region28: #{tpu_custom_call.1} parent=5 // pred_fallthru
        _
      %p188 = scmp.le.s32.totalorder 1, %s17
      %p189 = scmp.lt.s32.totalorder %s17, 5
      %p190 = pnand %p188, %p189
      %p191 = pneg %p190
      // Predicated region
      $region33: #{tpu_custom_call.1} parent=5 // pred_check
        _
      $region34: #{tpu_custom_call.1} parent=5 // pred_check_branch
        %193 = sbr.rel (%p190) target = $region36
      $region35: #{tpu_custom_call.1} parent=5 // pred_region
        %s194 = ssub.s32 %s17, 1
        %s195 = sand.u32 %s30, 1
        %s196 = scalar_lea.sflag [#allocation3], %s195
        %s197 = sand.u32 %s30, 1
        %s198 = smul.addr %s197, 8
        %s199 = scalar_lea.vmem [#allocation2], %s198
        // Predicated region
        $region37: #{tpu_custom_call.1} parent=35 // pred_check
          %p200 = pneg %p43
        $region38: #{tpu_custom_call.1} parent=35 // pred_check_branch
          %202 = sbr.rel (%p200) target = $region40
        $region39: #{tpu_custom_call.1} parent=35 // pred_region
          %203 = dma.done %s196, 128
        $region40: #{tpu_custom_call.1} parent=35 // pred_fallthru
          _
        // Predicated region
        $region41: #{tpu_custom_call.1} parent=35 // pred_check
          %p204 = pneg %p106
        $region42: #{tpu_custom_call.1} parent=35 // pred_check_branch
          %206 = sbr.rel (%p204) target = $region44
        $region43: #{tpu_custom_call.1} parent=35 // pred_region
          %207 = dma.done [#allocation6], 2048
        $region44: #{tpu_custom_call.1} parent=35 // pred_fallthru
          _
        %s208 = sand.u32 %s30, 1
        %s209 = scalar_lea.sflag [#allocation3], %s208
        %s210 = sand.u32 %s30, 1
        %s211 = smul.addr %s210, 8
        %s212 = scalar_lea.vmem [#allocation2], %s211
        %p213 = pneg %p43
        %p214 = pneg %p40
        %p215 = pneg %p64
        %p216 = pneg %p61
        %p217 = pneg %p85
        %p218 = pneg %p82
        %p219 = pneg %p106
        %p220 = pneg %p103
        %p221 = pneg %p132
        %p222 = pneg %p129
        %s223 = sand.u32 %s119, 1
        %s224 = scalar_lea.sflag [#allocation4], %s223
        %s225 = sand.u32 %s119, 1
        %s226 = smul.addr %s225, 8
        %s227 = scalar_lea.vmem [#allocation7], %s226
        %v228 = vld [vmem:[%s199] sm:$0xff]
        %v229 = vld [vmem:[#allocation5] sm:$0xff]
        %v230 = vld [vmem:[#allocation5 + $0x8] sm:$0xff]
        %v231 = vld [vmem:[#allocation5 + $0x10] sm:$0xff]
        %v232 = vld [vmem:[#allocation5 + $0x18] sm:$0xff]
        %v233 = vld [vmem:[#allocation5 + $0x20] sm:$0xff]
        %v234 = vld [vmem:[#allocation5 + $0x28] sm:$0xff]
        %v235 = vld [vmem:[#allocation5 + $0x30] sm:$0xff]
        %v236 = vld [vmem:[#allocation5 + $0x38] sm:$0xff]
        %v237 = vld [vmem:[#allocation5 + $0x40] sm:$0xff]
        %v238 = vld [vmem:[#allocation5 + $0x48] sm:$0xff]
        %v239 = vld [vmem:[#allocation5 + $0x50] sm:$0xff]
        %v240 = vld [vmem:[#allocation5 + $0x58] sm:$0xff]
        %v241 = vld [vmem:[#allocation5 + $0x60] sm:$0xff]
        %v242 = vld [vmem:[#allocation5 + $0x68] sm:$0xff]
        %v243 = vld [vmem:[#allocation5 + $0x70] sm:$0xff]
        %v244 = vld [vmem:[#allocation5 + $0x78] sm:$0xff]
        %245 = vmatprep.subr.mxu0 0.0
        %246 = vmatpush1.msra.mxu0 %v229
        %247 = vmatprep.subr.mxu0 0.0
        %248 = vmatpush1.msra.mxu0 %v230
        %249 = vmatprep.subr.mxu0 0.0
        %250 = vmatpush1.msra.mxu0 %v231
        %251 = vmatprep.subr.mxu0 0.0
        %252 = vmatpush1.msra.mxu0 %v232
        %253 = vmatprep.subr.mxu0 0.0
        %254 = vmatpush1.msra.mxu0 %v233
        %255 = vmatprep.subr.mxu0 0.0
        %256 = vmatpush1.msra.mxu0 %v234
        %257 = vmatprep.subr.mxu0 0.0
        %258 = vmatpush1.msra.mxu0 %v235
        %259 = vmatprep.subr.mxu0 0.0
        %260 = vmatpush1.msra.mxu0 %v236
        %261 = vmatprep.subr.mxu0 0.0
        %262 = vmatpush1.msra.mxu0 %v237
        %263 = vmatprep.subr.mxu0 0.0
        %264 = vmatpush1.msra.mxu0 %v238
        %265 = vmatprep.subr.mxu0 0.0
        %266 = vmatpush1.msra.mxu0 %v239
        %267 = vmatprep.subr.mxu0 0.0
        %268 = vmatpush1.msra.mxu0 %v240
        %269 = vmatprep.subr.mxu0 0.0
        %270 = vmatpush1.msra.mxu0 %v241
        %271 = vmatprep.subr.mxu0 0.0
        %272 = vmatpush1.msra.mxu0 %v242
        %273 = vmatprep.subr.mxu0 0.0
        %274 = vmatpush1.msra.mxu0 %v243
        %275 = vmatprep.subr.mxu0 0.0
        %276 = vmatpush1.msra.mxu0 %v244
        %277 = vmatprep.subr.mxu0 0.0
        %278 = vmatpush1.msra.mxu0 0.0
        %279 = vmatprep.subr.mxu0 0.0
        %280 = vmatpush1.msra.mxu0 0.0
        %281 = vmatprep.subr.mxu0 0.0
        %282 = vmatpush1.msra.mxu0 0.0
        %283 = vmatprep.subr.mxu0 0.0
        %284 = vmatpush1.msra.mxu0 0.0
        %285 = vmatprep.subr.mxu0 0.0
        %286 = vmatpush1.msra.mxu0 0.0
        %287 = vmatprep.subr.mxu0 0.0
        %288 = vmatpush1.msra.mxu0 0.0
        %289 = vmatprep.subr.mxu0 0.0
        %290 = vmatpush1.msra.mxu0 0.0
        %291 = vmatprep.subr.mxu0 0.0
        %292 = vmatpush1.msra.mxu0 0.0
        %293 = vmatprep.subr.mxu0 0.0
        %294 = vmatpush1.msra.mxu0 0.0
        %295 = vmatprep.subr.mxu0 0.0
        %296 = vmatpush1.msra.mxu0 0.0
        %297 = vmatprep.subr.mxu0 0.0
        %298 = vmatpush1.msra.mxu0 0.0
        %299 = vmatprep.subr.mxu0 0.0
        %300 = vmatpush1.msra.mxu0 0.0
        %301 = vmatprep.subr.mxu0 0.0
        %302 = vmatpush1.msra.mxu0 0.0
        %303 = vmatprep.subr.mxu0 0.0
        %304 = vmatpush1.msra.mxu0 0.0
        %305 = vmatprep.subr.mxu0 0.0
        %306 = vmatpush1.msra.mxu0 0.0
        %307 = vmatprep.subr.mxu0 0.0
        %308 = vmatpush1.msra.mxu0 0.0
        %309 = vmatprep.mubr.f32.mxu0 0.0
        %310 = vmatmul.mubr.f32.gmra.mrb[0].mxu0 %v228
        %v311 = vpop.f32.mrb[0].mxu0
        %v312 = vadd.f32 0.0, %v311
        %v313 = vpop.f32.mrb[0].mxu0
        %314 = vdwg.mxu0
        %v315 = vmul.f32 %v228, %v228
        %316 = vmatprep.subr.mxu0 0.0
        %317 = vmatpush1.msra.mxu0 %v229
        %318 = vmatprep.subr.mxu0 0.0
        %319 = vmatpush1.msra.mxu0 %v230
        %320 = vmatprep.subr.mxu0 0.0
        %321 = vmatpush1.msra.mxu0 %v231
        %322 = vmatprep.subr.mxu0 0.0
        %323 = vmatpush1.msra.mxu0 %v232
        %324 = vmatprep.subr.mxu0 0.0
        %325 = vmatpush1.msra.mxu0 %v233
        %326 = vmatprep.subr.mxu0 0.0
        %327 = vmatpush1.msra.mxu0 %v234
        %328 = vmatprep.subr.mxu0 0.0
        %329 = vmatpush1.msra.mxu0 %v235
        %330 = vmatprep.subr.mxu0 0.0
        %331 = vmatpush1.msra.mxu0 %v236
        %332 = vmatprep.subr.mxu0 0.0
        %333 = vmatpush1.msra.mxu0 %v237
        %334 = vmatprep.subr.mxu0 0.0
        %335 = vmatpush1.msra.mxu0 %v238
        %336 = vmatprep.subr.mxu0 0.0
        %337 = vmatpush1.msra.mxu0 %v239
        %338 = vmatprep.subr.mxu0 0.0
        %339 = vmatpush1.msra.mxu0 %v240
        %340 = vmatprep.subr.mxu0 0.0
        %341 = vmatpush1.msra.mxu0 %v241
        %342 = vmatprep.subr.mxu0 0.0
        %343 = vmatpush1.msra.mxu0 %v242
        %344 = vmatprep.subr.mxu0 0.0
        %345 = vmatpush1.msra.mxu0 %v243
        %346 = vmatprep.subr.mxu0 0.0
        %347 = vmatpush1.msra.mxu0 %v244
        %348 = vmatprep.subr.mxu0 0.0
        %349 = vmatpush1.msra.mxu0 0.0
        %350 = vmatprep.subr.mxu0 0.0
        %351 = vmatpush1.msra.mxu0 0.0
        %352 = vmatprep.subr.mxu0 0.0
        %353 = vmatpush1.msra.mxu0 0.0
        %354 = vmatprep.subr.mxu0 0.0
        %355 = vmatpush1.msra.mxu0 0.0
        %356 = vmatprep.subr.mxu0 0.0
        %357 = vmatpush1.msra.mxu0 0.0
        %358 = vmatprep.subr.mxu0 0.0
        %359 = vmatpush1.msra.mxu0 0.0
        %360 = vmatprep.subr.mxu0 0.0
        %361 = vmatpush1.msra.mxu0 0.0
        %362 = vmatprep.subr.mxu0 0.0
        %363 = vmatpush1.msra.mxu0 0.0
        %364 = vmatprep.subr.mxu0 0.0
        %365 = vmatpush1.msra.mxu0 0.0
        %366 = vmatprep.subr.mxu0 0.0
        %367 = vmatpush1.msra.mxu0 0.0
        %368 = vmatprep.subr.mxu0 0.0
        %369 = vmatpush1.msra.mxu0 0.0
        %370 = vmatprep.subr.mxu0 0.0
        %371 = vmatpush1.msra.mxu0 0.0
        %372 = vmatprep.subr.mxu0 0.0
        %373 = vmatpush1.msra.mxu0 0.0
        %374 = vmatprep.subr.mxu0 0.0
        %375 = vmatpush1.msra.mxu0 0.0
        %376 = vmatprep.subr.mxu0 0.0
        %377 = vmatpush1.msra.mxu0 0.0
        %378 = vmatprep.subr.mxu0 0.0
        %379 = vmatpush1.msra.mxu0 0.0
        %380 = vmatprep.mubr.f32.mxu0 0.0
        %381 = vmatmul.mubr.f32.gmra.mrb[0].mxu0 %v315
        %v382 = vpop.f32.mrb[0].mxu0
        %v383 = vadd.f32 0.0, %v382
        %v384 = vpop.f32.mrb[0].mxu0
        %385 = vdwg.mxu0
        %v386 = vmul.f32 %v312, 0.03125
        %v387 = vmul.f32 %v383, 0.03125
        %v388 = vmul.f32 %v386, %v386
        %v389 = vsub.f32 %v387, %v388
        %v390 = vmax.f32 %v389, 0.0
        %v391 = vadd.f32 %v390, 1e-06
        %v392 = vrsqrt.pop %v391
        %v393 = vsub.f32 %v228, %v386
        %v394 = vmul.f32 %v393, %v392
        %v395 = vld [vmem:[%s1] sm:$0x1]
        %v397 = vlaneseq
        %v398 = vshrl.u32 %v397, 7
        %v399 = vsub.s32 0, %v398
        %v400 = vrot.slane %v395, %v399
        %v402 = vmul.f32 %v394, %v400
        %v403 = vld [vmem:[%s2] sm:$0x1]
        %v405 = vlaneseq
        %v406 = vshrl.u32 %v405, 7
        %v407 = vsub.s32 0, %v406
        %v408 = vrot.slane %v403, %v407
        %v410 = vadd.f32 %v402, %v408
        %411 = vst [vmem:[%s227] sm:$0xff] %v410
        %s412 = sand.u32 %s119, 1
        %s413 = scalar_lea.sflag [#allocation4], %s412
        %s414 = sand.u32 %s119, 1
        %s415 = smul.addr %s414, 8
        %s416 = scalar_lea.vmem [#allocation7], %s415
        // Predicated region
        $region45: #{tpu_custom_call.1} parent=35 // pred_check
          %p417 = pneg %p129
        $region46: #{tpu_custom_call.1} parent=35 // pred_check_branch
          %419 = sbr.rel (%p417) target = $region48
        $region47: #{tpu_custom_call.1} parent=35 // pred_region
          %s421 = ssub.s32 128, 128
          %422 = vsyncadd %s413, %s421
          %s423 = smul.addr %s22, 128
          %s424 = scalar_lea.hbm %s4, %s423
          %s426 = sshll.u32 %s416, 4
          %s427 = int_to_ptr.vmem [resolvable:$true] %s426
          %429 = dma.vmem_to_hbm [thread:$0]  %s427, 128, %s424, %s413
        $region48: #{tpu_custom_call.1} parent=35 // pred_fallthru
          _
      $region36: #{tpu_custom_call.1} parent=5 // pred_fallthru
        _
      %p430 = scmp.le.s32.totalorder 2, %s17
      // Predicated region
      $region49: #{tpu_custom_call.1} parent=5 // pred_check
        %p431 = pneg %p430
      $region50: #{tpu_custom_call.1} parent=5 // pred_check_branch
        %433 = sbr.rel (%p431) target = $region52
      $region51: #{tpu_custom_call.1} parent=5 // pred_region
        %s434 = ssub.s32 %s17, 2
        // Predicated region
        $region53: #{tpu_custom_call.1} parent=51 // pred_check
          %p435 = pneg %p135
        $region54: #{tpu_custom_call.1} parent=51 // pred_check_branch
          %437 = sbr.rel (%p435) target = $region56
        $region55: #{tpu_custom_call.1} parent=51 // pred_region
          %s438 = sand.u32 %s120, 1
          %s439 = scalar_lea.sflag [#allocation4], %s438
          %s440 = sand.u32 %s120, 1
          %s441 = smul.addr %s440, 8
          %s442 = scalar_lea.vmem [#allocation7], %s441
          %443 = dma.done %s439, 128
        $region56: #{tpu_custom_call.1} parent=51 // pred_fallthru
          _
      $region52: #{tpu_custom_call.1} parent=5 // pred_fallthru
        _
    $region6: #{tpu_custom_call.1} parent=1 // loop_footer
      %s21 = sadd.s32 1, %s17
    $region7: #{tpu_custom_call.1} parent=1 // loop_footer_branch
      %16 = sbr.rel target = $region3
    $region8: #{tpu_custom_call.1} parent=1 // loop_exit
      _
    %444 = vsyncpa [#allocation3], 1
    %s445 = scalar_lea.sflag [#allocation3], 1
    %446 = vsyncpa %s445, 1
    %447 = vsyncpa [#allocation6], 1
    %448 = vsyncpa [#allocation4], 1
    %s449 = scalar_lea.sflag [#allocation4], 1
    %450 = vsyncpa %s449, 1

</llo_original>
